<compile_context>
chip_gen: v5e
topology: v5e:2x2
jax: 0.10.0
libtpu: 0.0.40
codegen_flags: <defaults>
</compile_context>

<pallas_src>
import functools
import math

import jax
import jax.numpy as jnp
from jax.experimental import pallas as pl
from jax.experimental.pallas import tpu as pltpu


def _concat_rows_kernel(chunks, *refs):
    """refs = (*in_refs, out_ref); all 2-D (tile_rows, width) VMEM tiles.

    Copies each input tile into its static column slice of the output tile.
    Offsets are Python ints, so when every chunk width is a multiple of 128
    (the lane-dense case) each store lowers to unmasked full-lane stores.
    """
    in_refs = refs[:-1]
    out_ref = refs[-1]
    off = 0
    for in_ref, c in zip(in_refs, chunks):
        out_ref[:, off:off + c] = in_ref[...]
        off += c


def pallas_concatenate(tensors, dim=0, vmem_budget_bytes=8 * 1024 * 1024):
    """Equivalent of torch.cat(tensors, dim=dim) as a Pallas TPU kernel."""
    assert len(tensors) >= 1
    ndim = tensors[0].ndim
    axis = dim if dim >= 0 else dim + ndim
    assert 0 <= axis < ndim

    dtype = tensors[0].dtype
    base = list(tensors[0].shape)
    sizes = []
    for t in tensors:
        assert t.dtype == dtype
        s = list(t.shape)
        assert len(s) == ndim
        for d in range(ndim):
            if d != axis:
                assert s[d] == base[d], "non-concat dims must match"
        sizes.append(s[axis])

    out_nd_shape = list(base)
    out_nd_shape[axis] = sum(sizes)
    out_nd_shape = tuple(out_nd_shape)

    # ---- Lane-dense 2-D views -------------------------------------------
    # Collapse dims before `axis` into `outer` rows and the concat axis plus
    # all trailing dims into the last (lane) axis.  Concatenating the N-D
    # tensors along `axis` is then exactly concatenating the 2-D views along
    # columns.  For NCHW / dim=1 this gives 1024-wide (multiple-of-128) chunks.
    outer = int(math.prod(base[:axis]))
    inner = int(math.prod(base[axis + 1:]))
    chunks = [sz * inner for sz in sizes]
    total = sum(chunks)

    views = [t.reshape(outer, c) for t, c in zip(tensors, chunks)]

    # ---- Tile the outer (row) dim against a conservative VMEM budget ------
    # Per grid step the auto-pipeline holds (inputs + output) double-buffered:
    # roughly 2 * (total + total) * tile_rows * itemsize bytes.
    itemsize = jnp.dtype(dtype).itemsize
    bytes_per_row = 2 * 2 * total * itemsize
    tile_rows = max(1, vmem_budget_bytes // bytes_per_row)
    if tile_rows >= outer:
        tile_rows = outer                      # single full-extent row block
    else:
        tile_rows = max(8, (tile_rows // 8) * 8)  # keep (8,128) tiling happy
    grid = (pl.cdiv(outer, tile_rows),)

    kernel = functools.partial(_concat_rows_kernel, tuple(chunks))

    out2d = pl.pallas_call(
        kernel,
        out_shape=jax.ShapeDtypeStruct((outer, total), dtype),
        grid_spec=pltpu.PrefetchScalarGridSpec(
            num_scalar_prefetch=0,
            grid=grid,
            in_specs=[pl.BlockSpec((tile_rows, c), lambda r: (r, 0))
                      for c in chunks],
            out_specs=pl.BlockSpec((tile_rows, total), lambda r: (r, 0)),
        ),
        compiler_params=pltpu.CompilerParams(
            dimension_semantics=("parallel",)),
    )(*views)

    return out2d.reshape(out_nd_shape)


if __name__ == "__main__":
    key = jax.random.PRNGKey(0)
    k1, k2, k3, k4 = jax.random.split(key, 4)

    # Small NCHW inputs, consistent with the concatenate test operand shapes.
    shape = (2, 4, 16, 16)
    xs = [
        jax.random.normal(k1, shape, dtype=jnp.float32),
        jax.random.normal(k2, shape, dtype=jnp.float32),
        jax.random.normal(k3, shape, dtype=jnp.float32),
    ]

    # Primary case: concat along channel dim (dim=1), as in torch.cat(x, dim=1).
    out = jax.block_until_ready(pallas_concatenate(xs, dim=1))
    ref = jnp.concatenate(xs, axis=1)
    assert out.shape == (2, 12, 16, 16), out.shape
    assert jnp.array_equal(out, ref), "mismatch vs jnp.concatenate (dim=1)"

    # Batch concat (dim=0) exercises outer == 1 / lane-only concat.
    out0 = jax.block_until_ready(pallas_concatenate(xs, dim=0))
    ref0 = jnp.concatenate(xs, axis=0)
    assert out0.shape == (6, 4, 16, 16), out0.shape
    assert jnp.array_equal(out0, ref0), "mismatch vs jnp.concatenate (dim=0)"

    # Unequal sizes along the concat dim still use static lane-aligned offsets.
    y = jax.random.normal(k4, (2, 8, 16, 16), dtype=jnp.float32)
    outu = jax.block_until_ready(pallas_concatenate([xs[0], y], dim=1))
    refu = jnp.concatenate([xs[0], y], axis=1)
    assert outu.shape == (2, 12, 16, 16), outu.shape
    assert jnp.array_equal(outu, refu), "mismatch vs jnp.concatenate (unequal)"

    print("KERNEL_OK")
</pallas_src>

<mosaic_0001>
module attributes {stable_mosaic.version = 11 : i64} {
  func.func @_concat_rows_kernel(%arg0: i32, %arg1: memref<2x1024xf32, #tpu.memory_space<vmem>>, %arg2: memref<2x1024xf32, #tpu.memory_space<vmem>>, %arg3: memref<2x1024xf32, #tpu.memory_space<vmem>>, %arg4: memref<2x3072xf32, #tpu.memory_space<vmem>>) attributes {dimension_semantics = [#tpu.dimension_semantics<parallel>], iteration_bounds = array<i64: 1>, scalar_prefetch = 0 : i64, scratch_operands = 0 : i64, tpu.core_type = #tpu.core_type<tc>, window_params = [{transform_indices = @transform_0, window_bounds = array<i64: 2, 1024>}, {transform_indices = @transform_1, window_bounds = array<i64: 2, 1024>}, {transform_indices = @transform_2, window_bounds = array<i64: 2, 1024>}, {transform_indices = @transform_3, window_bounds = array<i64: 2, 3072>}]} {
    %c0 = arith.constant 0 : index
    %c0_0 = arith.constant 0 : index
    %0 = vector.load %arg1[%c0, %c0_0] : memref<2x1024xf32, #tpu.memory_space<vmem>>, vector<2x1024xf32>
    %c0_1 = arith.constant 0 : index
    %c0_2 = arith.constant 0 : index
    %1 = vector.load %arg4[%c0_1, %c0_2] : memref<2x3072xf32, #tpu.memory_space<vmem>>, vector<2x1024xf32>
    tpu.vector_store %arg4[%c0_1, %c0_2], %0 {strides = array<i32>} : memref<2x3072xf32, #tpu.memory_space<vmem>>, vector<2x1024xf32>,
    %c0_3 = arith.constant 0 : index
    %c0_4 = arith.constant 0 : index
    %2 = vector.load %arg2[%c0_3, %c0_4] : memref<2x1024xf32, #tpu.memory_space<vmem>>, vector<2x1024xf32>
    %c0_5 = arith.constant 0 : index
    %c1024 = arith.constant 1024 : index
    %3 = vector.load %arg4[%c0_5, %c1024] : memref<2x3072xf32, #tpu.memory_space<vmem>>, vector<2x1024xf32>
    tpu.vector_store %arg4[%c0_5, %c1024], %2 {strides = array<i32>} : memref<2x3072xf32, #tpu.memory_space<vmem>>, vector<2x1024xf32>,
    %c0_6 = arith.constant 0 : index
    %c0_7 = arith.constant 0 : index
    %4 = vector.load %arg3[%c0_6, %c0_7] : memref<2x1024xf32, #tpu.memory_space<vmem>>, vector<2x1024xf32>
    %c0_8 = arith.constant 0 : index
    %c2048 = arith.constant 2048 : index
    %5 = vector.load %arg4[%c0_8, %c2048] : memref<2x3072xf32, #tpu.memory_space<vmem>>, vector<2x1024xf32>
    tpu.vector_store %arg4[%c0_8, %c2048], %4 {strides = array<i32>} : memref<2x3072xf32, #tpu.memory_space<vmem>>, vector<2x1024xf32>,
    return
  }
  func.func @transform_0(%arg0: i32) -> (i32, i32) {
    %c0_i32 = arith.constant 0 : i32
    %c0_i32_0 = arith.constant 0 : i32
    return %arg0, %c0_i32 : i32, i32
  }
  func.func @transform_1(%arg0: i32) -> (i32, i32) {
    %c0_i32 = arith.constant 0 : i32
    %c0_i32_0 = arith.constant 0 : i32
    return %arg0, %c0_i32 : i32, i32
  }
  func.func @transform_2(%arg0: i32) -> (i32, i32) {
    %c0_i32 = arith.constant 0 : i32
    %c0_i32_0 = arith.constant 0 : i32
    return %arg0, %c0_i32 : i32, i32
  }
  func.func @transform_3(%arg0: i32) -> (i32, i32) {
    %c0_i32 = arith.constant 0 : i32
    %c0_i32_0 = arith.constant 0 : i32
    return %arg0, %c0_i32 : i32, i32
  }
}

</mosaic_0001>

<llo_original>
// kernel: tpu_custom_call.1
$region0: #{tpu_custom_call.1}
  #allocation0 [shape = 'u32[]', space=smem, size = 0x4, offset = 0x4, fixed_abs, tag = 'smem constant byte address 0x4 - core index']
  #allocation1 [shape = 'u32[72,128]{1,0:T(1,128)}', space=vmem, size = 0x9000, scoped, tag = 'internal scratch']
  %s0 = inlined_call_operand.hbm [shape: f32[2,1024], index: 0, kind: input, shape index: {}]
  %s1 = inlined_call_operand.hbm [shape: f32[2,1024], index: 1, kind: input, shape index: {}]
  %s2 = inlined_call_operand.hbm [shape: f32[2,1024], index: 2, kind: input, shape index: {}]
  %s3 = inlined_call_operand.hbm [shape: f32[2,3072], index: 3, kind: output, shape index: {}]
  %s4 = sld [smem:[#allocation0]]
  $region34: #{tpu_custom_call.1} parent=0
    _
  %s6 = ssub.s32 1, %s4
  %s7 = scalar_select 0, %s6, %s4
  $region1: #{tpu_custom_call.1} parent=0
    #allocation2 [shape = 'u8[8192]{0}', space=vmem, size = 0x2000, scoped, tag = 'input window, operand 0, single buffered']
    #allocation3 [shape = 's32[1]{0}', space=sflag, size = 0x4, scoped, tag = 'scoped memory for tpu_custom_call.1']
    #allocation4 [shape = 's32[1]{0}', space=sflag, size = 0x4, scoped, tag = 'scoped memory for tpu_custom_call.1']
    #allocation5 [shape = 'u8[8192]{0}', space=vmem, size = 0x2000, scoped, tag = 'input window, operand 1, single buffered']
    #allocation6 [shape = 's32[1]{0}', space=sflag, size = 0x4, scoped, tag = 'scoped memory for tpu_custom_call.1']
    #allocation7 [shape = 'u8[8192]{0}', space=vmem, size = 0x2000, scoped, tag = 'input window, operand 2, single buffered']
    #allocation8 [shape = 'u8[24576]{0}', space=vmem, size = 0x6000, scoped, tag = 'output window, operand 0, single buffered']
    %8 = vsyncpa [#allocation3], 0
    %9 = vsyncpa [#allocation6], 0
    %10 = vsyncpa [#allocation4], 0
    // Predicated region
    $region2: #{tpu_custom_call.1} parent=1 // pred_check
      _
    $region3: #{tpu_custom_call.1} parent=1 // pred_check_branch
      %12 = sbr.rel (0) target = $region5
    $region4: #{tpu_custom_call.1} parent=1 // pred_region
      %14 = vsyncadd [#allocation3], 0
      %s16 = sshll.u32 %s0, 4
      %s17 = int_to_ptr.hbm [resolvable:$true] %s16
      %s18 = sshll.u32 [#allocation2], 4
      %s19 = int_to_ptr.vmem [resolvable:$true] %s18
      %21 = dma.hbm_to_vmem [thread:$0]  %s17, 256, %s19, [#allocation3]
    $region5: #{tpu_custom_call.1} parent=1 // pred_fallthru
      _
    // Predicated region
    $region6: #{tpu_custom_call.1} parent=1 // pred_check
      _
    $region7: #{tpu_custom_call.1} parent=1 // pred_check_branch
      %23 = sbr.rel (0) target = $region9
    $region8: #{tpu_custom_call.1} parent=1 // pred_region
      %25 = vsyncadd [#allocation6], 0
      %s27 = sshll.u32 %s1, 4
      %s28 = int_to_ptr.hbm [resolvable:$true] %s27
      %s29 = sshll.u32 [#allocation5], 4
      %s30 = int_to_ptr.vmem [resolvable:$true] %s29
      %32 = dma.hbm_to_vmem [thread:$0]  %s28, 256, %s30, [#allocation6]
    $region9: #{tpu_custom_call.1} parent=1 // pred_fallthru
      _
    // Predicated region
    $region10: #{tpu_custom_call.1} parent=1 // pred_check
      _
    $region11: #{tpu_custom_call.1} parent=1 // pred_check_branch
      %34 = sbr.rel (0) target = $region13
    $region12: #{tpu_custom_call.1} parent=1 // pred_region
      %36 = vsyncadd [#allocation6], 0
      %s38 = sshll.u32 %s2, 4
      %s39 = int_to_ptr.hbm [resolvable:$true] %s38
      %s40 = sshll.u32 [#allocation7], 4
      %s41 = int_to_ptr.vmem [resolvable:$true] %s40
      %43 = dma.hbm_to_vmem [thread:$0]  %s39, 256, %s41, [#allocation6]
    $region13: #{tpu_custom_call.1} parent=1 // pred_fallthru
      _
    // Predicated region
    $region14: #{tpu_custom_call.1} parent=1 // pred_check
      _
    $region15: #{tpu_custom_call.1} parent=1 // pred_check_branch
      %45 = sbr.rel (0) target = $region17
    $region16: #{tpu_custom_call.1} parent=1 // pred_region
      %47 = dma.done [#allocation3], 256
    $region17: #{tpu_custom_call.1} parent=1 // pred_fallthru
      _
    // Predicated region
    $region18: #{tpu_custom_call.1} parent=1 // pred_check
      _
    $region19: #{tpu_custom_call.1} parent=1 // pred_check_branch
      %49 = sbr.rel (0) target = $region21
    $region20: #{tpu_custom_call.1} parent=1 // pred_region
      %51 = dma.done [#allocation6], 256
    $region21: #{tpu_custom_call.1} parent=1 // pred_fallthru
      _
    // Predicated region
    $region22: #{tpu_custom_call.1} parent=1 // pred_check
      _
    $region23: #{tpu_custom_call.1} parent=1 // pred_check_branch
      %53 = sbr.rel (0) target = $region25
    $region24: #{tpu_custom_call.1} parent=1 // pred_region
      %55 = dma.done [#allocation6], 256
    $region25: #{tpu_custom_call.1} parent=1 // pred_fallthru
      _
    %v56 = vld [vmem:[#allocation2] sm:$0xff]
    %v57 = vld [vmem:[#allocation2 + $0x8] sm:$0xff]
    %58 = vst [vmem:[#allocation8] sm:$0xff] %v56
    %59 = vst [vmem:[#allocation8 + $0x8] sm:$0xff] %v57
    %v60 = vld [vmem:[#allocation5] sm:$0xff]
    %v61 = vld [vmem:[#allocation5 + $0x8] sm:$0xff]
    %62 = vst [vmem:[#allocation8 + $0x10] sm:$0xff] %v60
    %63 = vst [vmem:[#allocation8 + $0x18] sm:$0xff] %v61
    %v64 = vld [vmem:[#allocation7] sm:$0xff]
    %v65 = vld [vmem:[#allocation7 + $0x8] sm:$0xff]
    %66 = vst [vmem:[#allocation8 + $0x20] sm:$0xff] %v64
    %67 = vst [vmem:[#allocation8 + $0x28] sm:$0xff] %v65
    // Predicated region
    $region26: #{tpu_custom_call.1} parent=1 // pred_check
      _
    $region27: #{tpu_custom_call.1} parent=1 // pred_check_branch
      %69 = sbr.rel (0) target = $region29
    $region28: #{tpu_custom_call.1} parent=1 // pred_region
      %71 = vsyncadd [#allocation4], 0
      %s73 = sshll.u32 [#allocation8], 4
      %s74 = int_to_ptr.vmem [resolvable:$true] %s73
      %s75 = sshll.u32 %s3, 4
      %s76 = int_to_ptr.hbm [resolvable:$true] %s75
      %78 = dma.vmem_to_hbm [thread:$0]  %s74, 768, %s76, [#allocation4]
    $region29: #{tpu_custom_call.1} parent=1 // pred_fallthru
      _
    // Predicated region
    $region30: #{tpu_custom_call.1} parent=1 // pred_check
      _
    $region31: #{tpu_custom_call.1} parent=1 // pred_check_branch
      %80 = sbr.rel (0) target = $region33
    $region32: #{tpu_custom_call.1} parent=1 // pred_region
      %82 = dma.done [#allocation4], 768
    $region33: #{tpu_custom_call.1} parent=1 // pred_fallthru
      _
    %83 = vsyncpa [#allocation3], 1
    %84 = vsyncpa [#allocation6], 1
    %85 = vsyncpa [#allocation4], 1

</llo_original>
